<compile_context>
chip_gen: v7x
topology: tpu7x:2x2x1
jax: 0.10.0
libtpu: 0.0.40
codegen_flags: <defaults>
</compile_context>

<pallas_src>
import functools

import jax
import jax.numpy as jnp
from jax.experimental import pallas as pl
from jax.experimental.pallas import tpu as pltpu


def _round_up(v, m):
    return ((v + m - 1) // m) * m


def _vmem_limit_bytes():
    # Chip-aware scoped-VMEM budget: half of physical, capped at 64 MiB.
    # (v5e/v6e: 128 MiB physical -> 64 MiB; v7x: 64 MiB physical -> 32 MiB.)
    try:
        cap = int(pltpu.get_tpu_info().vmem_capacity_bytes)
    except Exception:
        cap = 64 * 1024 * 1024  # conservative fallback
    return min(64 * 1024 * 1024, max(16 * 1024 * 1024, cap // 2))


def _logistic_cutted_kernel(x_ref, o_ref, acc_ref, *, n, tile_n, tbb, ragged):
    # x_ref:   (tb2, tile_n) tile of the (B*2, N) flattened input
    # o_ref:   (tbb, 2)      output logits block (written on last k step)
    # acc_ref: (tb2, 1)      f32 running per-row partial sums (VMEM scratch)
    k = pl.program_id(1)
    nk = pl.num_programs(1)

    @pl.when(k == 0)
    def _init():
        acc_ref[...] = jnp.zeros_like(acc_ref)

    if ragged:
        last = nk - 1

        @pl.when(k < last)
        def _accum_full():
            acc_ref[...] += jnp.sum(
                x_ref[...].astype(jnp.float32), axis=1, keepdims=True)

        @pl.when(k == last)
        def _accum_masked():
            # Pallas does not zero-fill out-of-range block reads: mask the
            # overrun columns of the ragged last tile before accumulating.
            # (1, tile_n) iota; jnp.where broadcasts it across rows.
            col = jax.lax.broadcasted_iota(jnp.int32, (1, tile_n), 1)
            valid = (col + k * tile_n) < n
            xm = jnp.where(valid, x_ref[...].astype(jnp.float32), 0.0)
            acc_ref[...] += jnp.sum(xm, axis=1, keepdims=True)
    else:
        acc_ref[...] += jnp.sum(
            x_ref[...].astype(jnp.float32), axis=1, keepdims=True)

    @pl.when(k == nk - 1)
    def _finalize():
        # Rows of acc alternate (class 0, class 1) per example; gather each
        # class with a sublane-strided read and do a stable pairwise
        # log-softmax. No unrolled per-row stores, no staging scratch.
        s0 = acc_ref[pl.ds(0, tbb, stride=2), :]   # (tbb, 1) class-0 sums
        s1 = acc_ref[pl.ds(1, tbb, stride=2), :]   # (tbb, 1) class-1 sums
        m = jnp.maximum(s0, s1)
        lse = m + jnp.log(jnp.exp(s0 - m) + jnp.exp(s1 - m))
        o_ref[:, 0:1] = (s0 - lse).astype(o_ref.dtype)
        o_ref[:, 1:2] = (s1 - lse).astype(o_ref.dtype)


def logistic_cutted_forward(x, *, target_block_bytes=None):
    """x: (B, C, H, W) float array (NCHW). Returns (B, 2) log-softmax logits."""
    batch = x.shape[0]
    total = 1
    for d in x.shape[1:]:
        total *= d
    assert total % 2 == 0, "per-example element count must be divisible by 2"
    n = total // 2
    b2 = 2 * batch

    # Row-major reshape: row r = (example r//2, class r%2); identical element
    # order to torch's x.view(batch, 2, -1). No padding copy is made.
    x_flat = jnp.reshape(x, (b2, n))

    # Row blocking: keep (class-0, class-1) pairs inside one block. Prefer
    # tb2 = 16 so the (tbb=8, 2) output block satisfies the sublane constraint
    # and multiple row blocks can be sharded across TensorCores; grow tile_n,
    # not tb2, when enlarging blocks.
    tb2 = b2
    if b2 > 16:
        for cand in (16, 32, 64, 128, 256):
            if b2 % cand == 0:
                tb2 = cand
                break
    tbb = tb2 // 2
    # TODO(synk): when b2 <= 16 there is a single row block, so on v7x the
    # second TensorCore idles; a reduction-axis core split + tiny cross-core
    # combine would recover it for small batches.

    itemsize = jnp.dtype(x.dtype).itemsize
    vmem_limit = _vmem_limit_bytes()
    if target_block_bytes is None:
        # ~8 MiB blocks (double-buffered) comfortably under the scoped limit.
        target_block_bytes = min(8 * 1024 * 1024, vmem_limit // 4)

    # dtype-aware sublane padding of the rows actually moved per block
    # (8 rows for f32, 16 for bf16, 32 for int8).
    pad_rows = 8 * max(1, 4 // itemsize)
    sub = _round_up(tb2, pad_rows)
    tile_n = max(128, (target_block_bytes // (sub * itemsize)) // 128 * 128)
    tile_n = min(tile_n, _round_up(n, 128))

    grid = (b2 // tb2, pl.cdiv(n, tile_n))
    ragged = (n % tile_n) != 0

    kernel = functools.partial(
        _logistic_cutted_kernel, n=n, tile_n=tile_n, tbb=tbb, ragged=ragged)

    return pl.pallas_call(
        kernel,
        out_shape=jax.ShapeDtypeStruct((batch, 2), x.dtype),
        grid_spec=pltpu.PrefetchScalarGridSpec(
            num_scalar_prefetch=0,
            grid=grid,
            in_specs=[
                pl.BlockSpec((tb2, tile_n), lambda i, k: (i, k)),
            ],
            out_specs=pl.BlockSpec((tbb, 2), lambda i, k: (i, 0)),
            scratch_shapes=[
                pltpu.VMEM((tb2, 1), jnp.float32),  # per-row running sums
            ],
        ),
        compiler_params=pltpu.CompilerParams(
            dimension_semantics=("parallel", "arbitrary"),
            vmem_limit_bytes=vmem_limit,
        ),
    )(x_flat)


def _reference(x):
    batch = x.shape[0]
    s = jnp.sum(jnp.reshape(x, (batch, 2, -1)), axis=2)
    return jax.nn.log_softmax(s, axis=1)


def _check(x, **kwargs):
    out = jax.block_until_ready(logistic_cutted_forward(x, **kwargs))
    ref = _reference(x)
    assert out.shape == (x.shape[0], 2), out.shape
    assert jnp.allclose(out, ref, atol=1e-4, rtol=1e-4), (out, ref)
    return out


if __name__ == "__main__":
    key = jax.random.PRNGKey(0)
    k0, k1, k2, k3 = jax.random.split(key, 4)

    # Primary case (matches the module's view(batch, 2, -1)): NCHW input.
    x = jax.random.normal(k0, (2, 4, 16, 16), dtype=jnp.float32)
    _check(x)

    # Ragged reduction length (n not a multiple of 128) -> in-kernel masking.
    x_ragged = jax.random.normal(k1, (2, 6, 10, 10), dtype=jnp.float32)
    _check(x_ragged)

    # Multi-step reduction grid with a ragged last tile (small tile on purpose).
    x_multi = jax.random.normal(k2, (2, 4, 20, 20), dtype=jnp.float32)
    _check(x_multi, target_block_bytes=16 * 1024)

    # Multiple row blocks (parallel grid axis > 1, tb2=16 path).
    x_big = jax.random.normal(k3, (16, 4, 16, 16), dtype=jnp.float32)
    _check(x_big)

    print("KERNEL_OK")
</pallas_src>

<mosaic_0001>
module attributes {stable_mosaic.version = 11 : i64} {
  func.func @_logistic_cutted_kernel(%arg0: i32, %arg1: i32, %arg2: memref<4x512xf32, #tpu.memory_space<vmem>>, %arg3: memref<2x2xf32, #tpu.memory_space<vmem>>, %arg4: memref<4x1xf32, #tpu.memory_space<vmem>>) attributes {dimension_semantics = [#tpu.dimension_semantics<parallel>, #tpu.dimension_semantics<arbitrary>], iteration_bounds = array<i64: 1, 1>, scalar_prefetch = 0 : i64, scratch_operands = 1 : i64, tpu.core_type = #tpu.core_type<tc>, window_params = [{transform_indices = @transform_0, window_bounds = array<i64: 4, 512>}, {transform_indices = @transform_1, window_bounds = array<i64: 2, 2>}]} {
    %c0_i32 = arith.constant 0 : i32
    %0 = arith.cmpi eq, %arg1, %c0_i32 : i32
    %1 = arith.extui %0 : i1 to i32
    %c0_i32_0 = arith.constant 0 : i32
    %2 = arith.cmpi ne, %1, %c0_i32_0 : i32
    scf.if %2 {
      %cst_8 = arith.constant 0.000000e+00 : f32
      %12 = vector.broadcast %cst_8 : f32 to vector<4x1xf32>
      %c0_9 = arith.constant 0 : index
      %c0_10 = arith.constant 0 : index
      %13 = vector.load %arg4[%c0_9, %c0_10] : memref<4x1xf32, #tpu.memory_space<vmem>>, vector<4x1xf32>
      tpu.vector_store %arg4[%c0_9, %c0_10], %12 {strides = array<i32>} : memref<4x1xf32, #tpu.memory_space<vmem>>, vector<4x1xf32>,
    } else {
    }
    %c0 = arith.constant 0 : index
    %c0_1 = arith.constant 0 : index
    %3 = vector.load %arg4[%c0, %c0_1] : memref<4x1xf32, #tpu.memory_space<vmem>>, vector<4x1xf32>
    %c0_2 = arith.constant 0 : index
    %c0_3 = arith.constant 0 : index
    %4 = vector.load %arg2[%c0_2, %c0_3] : memref<4x512xf32, #tpu.memory_space<vmem>>, vector<4x512xf32>
    %cst = arith.constant dense<0.000000e+00> : vector<4xf32>
    %5 = vector.multi_reduction <add>, %4, %cst [1] : vector<4x512xf32> to vector<4xf32>
    %6 = vector.shape_cast %5 : vector<4xf32> to vector<4x1xf32>
    %7 = arith.addf %3, %6 : vector<4x1xf32>
    %c0_4 = arith.constant 0 : index
    %c0_5 = arith.constant 0 : index
    %8 = vector.load %arg4[%c0_4, %c0_5] : memref<4x1xf32, #tpu.memory_space<vmem>>, vector<4x1xf32>
    tpu.vector_store %arg4[%c0_4, %c0_5], %7 {strides = array<i32>} : memref<4x1xf32, #tpu.memory_space<vmem>>, vector<4x1xf32>,
    %c0_i32_6 = arith.constant 0 : i32
    %9 = arith.cmpi eq, %arg1, %c0_i32_6 : i32
    %10 = arith.extui %9 : i1 to i32
    %c0_i32_7 = arith.constant 0 : i32
    %11 = arith.cmpi ne, %10, %c0_i32_7 : i32
    scf.if %11 {
      %c0_8 = arith.constant 0 : index
      %c0_9 = arith.constant 0 : index
      %12 = tpu.strided_load %arg4[%c0_8, %c0_9] {strides = array<i32: 2, 1>} : memref<4x1xf32, #tpu.memory_space<vmem>>, vector<2x1xf32>
      %c1 = arith.constant 1 : index
      %c0_10 = arith.constant 0 : index
      %13 = tpu.strided_load %arg4[%c1, %c0_10] {strides = array<i32: 2, 1>} : memref<4x1xf32, #tpu.memory_space<vmem>>, vector<2x1xf32>
      %14 = arith.maximumf %12, %13 : vector<2x1xf32>
      %15 = arith.subf %12, %14 : vector<2x1xf32>
      %16 = math.exp %15 : vector<2x1xf32>
      %17 = arith.subf %13, %14 : vector<2x1xf32>
      %18 = math.exp %17 : vector<2x1xf32>
      %19 = arith.addf %16, %18 : vector<2x1xf32>
      %20 = math.log %19 : vector<2x1xf32>
      %21 = arith.addf %14, %20 : vector<2x1xf32>
      %22 = arith.subf %12, %21 : vector<2x1xf32>
      %c0_11 = arith.constant 0 : index
      %c0_12 = arith.constant 0 : index
      %23 = vector.load %arg3[%c0_11, %c0_12] : memref<2x2xf32, #tpu.memory_space<vmem>>, vector<2x1xf32>
      tpu.vector_store %arg3[%c0_11, %c0_12], %22 {strides = array<i32>} : memref<2x2xf32, #tpu.memory_space<vmem>>, vector<2x1xf32>,
      %24 = arith.subf %13, %21 : vector<2x1xf32>
      %c0_13 = arith.constant 0 : index
      %c1_14 = arith.constant 1 : index
      %25 = vector.load %arg3[%c0_13, %c1_14] : memref<2x2xf32, #tpu.memory_space<vmem>>, vector<2x1xf32>
      tpu.vector_store %arg3[%c0_13, %c1_14], %24 {strides = array<i32>} : memref<2x2xf32, #tpu.memory_space<vmem>>, vector<2x1xf32>,
    } else {
    }
    return
  }
  func.func @transform_0(%arg0: i32, %arg1: i32) -> (i32, i32) {
    %c0_i32 = arith.constant 0 : i32
    return %arg0, %arg1 : i32, i32
  }
  func.func @transform_1(%arg0: i32, %arg1: i32) -> (i32, i32) {
    %c0_i32 = arith.constant 0 : i32
    %c0_i32_0 = arith.constant 0 : i32
    return %arg0, %c0_i32 : i32, i32
  }
}

</mosaic_0001>

<llo_original>
// kernel: tpu_custom_call.1
$region0: #{tpu_custom_call.1}
  #allocation0 [shape = 'u32[]', space=smem, size = 0x4, offset = 0x4, fixed_abs, tag = 'smem constant byte address 0x4 - core index']
  #allocation1 [shape = 'u32[144,128]{1,0:T(1,128)}', space=vmem, size = 0x12000, scoped, tag = 'internal scratch']
  #allocation2 [shape = 'f32[4,1]{1,0:T(4,128)}', space=vmem, size = 0x800, scoped, tag = 'scratch operand']
  %s0 = inlined_call_operand.hbm [shape: f32[4,512], index: 0, kind: input, shape index: {}]
  %s1 = inlined_call_operand.hbm [shape: f32[2,2], index: 1, kind: output, shape index: {}]
  %s2 = sld [smem:[#allocation0]]
  $region26: #{tpu_custom_call.1} parent=0
    _
  %s4 = ssub.s32 1, %s2
  %s5 = scalar_select 0, %s4, %s2
  $region1: #{tpu_custom_call.1} parent=0
    #allocation3 [shape = 'u8[8192]{0}', space=vmem, size = 0x2000, scoped, tag = 'input window, operand 0, single buffered']
    #allocation4 [shape = 's32[1]{0}', space=sflag, size = 0x4, scoped, tag = 'scoped memory for tpu_custom_call.1']
    #allocation5 [shape = 's32[1]{0}', space=sflag, size = 0x4, scoped, tag = 'scoped memory for tpu_custom_call.1']
    #allocation6 [shape = 'u8[1024]{0}', space=vmem, size = 0x400, scoped, tag = 'output window, operand 0, single buffered']
    %6 = vsyncpa [#allocation4], 0
    %7 = vsyncpa [#allocation5], 0
    // Predicated region
    $region2: #{tpu_custom_call.1} parent=1 // pred_check
      _
    $region3: #{tpu_custom_call.1} parent=1 // pred_check_branch
      %9 = sbr.rel (0) target = $region5
    $region4: #{tpu_custom_call.1} parent=1 // pred_region
      %s11 = ssub.s32 256, 256
      %12 = vsyncadd [#allocation4], %s11
      %s14 = sshll.u32 [#allocation3], 4
      %s15 = int_to_ptr.vmem [resolvable:$true] %s14
      %17 = dma.hbm_to_vmem [thread:$0]  %s0, 256, %s15, [#allocation4]
    $region5: #{tpu_custom_call.1} parent=1 // pred_fallthru
      _
    // Predicated region
    $region6: #{tpu_custom_call.1} parent=1 // pred_check
      _
    $region7: #{tpu_custom_call.1} parent=1 // pred_check_branch
      %19 = sbr.rel (0) target = $region9
    $region8: #{tpu_custom_call.1} parent=1 // pred_region
      %20 = dma.done [#allocation4], 256
    $region9: #{tpu_custom_call.1} parent=1 // pred_fallthru
      _
    %p21 = scmp.eq.s32.totalorder 0, 0
    // Predicated region
    $region10: #{tpu_custom_call.1} parent=1 // pred_check
      %p22 = pneg %p21
    $region11: #{tpu_custom_call.1} parent=1 // pred_check_branch
      %24 = sbr.rel (%p22) target = $region13
    $region12: #{tpu_custom_call.1} parent=1 // pred_region
      %vm25 = vcmask 3072
      %26 = vst.msk [vmem:[#allocation2] sm:$0xf] %vm25, 0.0
    $region13: #{tpu_custom_call.1} parent=1 // pred_fallthru
      _
    %v27 = vld [vmem:[#allocation2] sm:$0xf]
    %v28 = vld [vmem:[#allocation3] sm:$0xff]
    %v29 = vld [vmem:[#allocation3 + $0x8] sm:$0xff]
    %v32 = vcombine.high %v28, %v28
    %v33 = vcombine.high %v29, %v29
    %vm36 = vcmask 1043456
    %v37 = vsel %vm36, %v28, 0.0
    %v38 = vsel %vm36, %v32, 0.0
    %v39 = vadd.f32 %v37, %v38
    %v40 = vsel %vm36, %v29, 0.0
    %v41 = vadd.f32 %v39, %v40
    %v42 = vsel %vm36, %v33, 0.0
    %v43 = vadd.f32 %v41, %v42
    %44 = vadd.xlane.f32.xlu0 %v43
    %v45 = vpop.xlane.xlu0 %44
    %v46 = vadd.f32 %v27, %v45
    %vm47 = vcmask 3072
    %48 = vst.msk [vmem:[#allocation2] sm:$0xf] %vm47, %v46
    // Predicated region
    $region14: #{tpu_custom_call.1} parent=1 // pred_check
      %p49 = pneg %p21
    $region15: #{tpu_custom_call.1} parent=1 // pred_check_branch
      %51 = sbr.rel (%p49) target = $region17
    $region16: #{tpu_custom_call.1} parent=1 // pred_region
      %v52 = vld [vmem:[#allocation2] ss:$2 sm:$0x3]
      %s53 = scalar_lea.vmem [#allocation2], 1
      %v54 = vld [vmem:[%s53] ss:$2 sm:$0x3]
      %v55 = vmax.f32 %v52, %v54
      %v56 = vsub.f32 %v52, %v55
      %v57 = vmul.f32 %v56, 1.442695
      %v58 = vpow.pop %v57
      %v59 = vsub.f32 %v54, %v55
      %v60 = vmul.f32 %v59, 1.442695
      %v61 = vpow.pop %v60
      %v62 = vadd.f32 %v58, %v61
      %v63 = vlog2.pop %v62
      %v64 = vmul.f32 %v63, 0.6931472
      %v65 = vadd.f32 %v55, %v64
      %v66 = vsub.f32 %v52, %v65
      %vm67 = vcmask 1024
      %68 = vst.msk [vmem:[#allocation6] sm:$0x3] %vm67, %v66
      %v69 = vsub.f32 %v54, %v65
      %71 = vrot.lane.b32.xlu0 %v69, 1
      %v72 = vpop.permute.xlu0 %71
      %vm74 = vcmask 9224
      %75 = vst.msk [vmem:[#allocation6] sm:$0x3] %vm74, %v72
    $region17: #{tpu_custom_call.1} parent=1 // pred_fallthru
      _
    // Predicated region
    $region18: #{tpu_custom_call.1} parent=1 // pred_check
      _
    $region19: #{tpu_custom_call.1} parent=1 // pred_check_branch
      %77 = sbr.rel (0) target = $region21
    $region20: #{tpu_custom_call.1} parent=1 // pred_region
      %s79 = ssub.s32 32, 32
      %80 = vsyncadd [#allocation5], %s79
      %s82 = sshll.u32 [#allocation6], 4
      %s83 = int_to_ptr.vmem [resolvable:$true] %s82
      %85 = dma.vmem_to_hbm [thread:$0]  %s83, 32, %s1, [#allocation5]
    $region21: #{tpu_custom_call.1} parent=1 // pred_fallthru
      _
    // Predicated region
    $region22: #{tpu_custom_call.1} parent=1 // pred_check
      _
    $region23: #{tpu_custom_call.1} parent=1 // pred_check_branch
      %87 = sbr.rel (0) target = $region25
    $region24: #{tpu_custom_call.1} parent=1 // pred_region
      %88 = dma.done [#allocation5], 32
    $region25: #{tpu_custom_call.1} parent=1 // pred_fallthru
      _
    %89 = vsyncpa [#allocation4], 1
    %90 = vsyncpa [#allocation5], 1

</llo_original>
